<compile_context>
chip_gen: v6e
topology: v6e:2x2x1
jax: 0.10.0
libtpu: 0.0.40
codegen_flags: <defaults>
</compile_context>

<pallas_src>
import jax
import jax.numpy as jnp
from jax.experimental import pallas as pl
from jax.experimental.pallas import tpu as pltpu


def ffnnc_kernel(x_ref, w1_ref, b1_ref, w2_ref, b2_ref, w3_ref, b3_ref, o_ref):
    # Feature-major layout: every activation is (features, batch_tile), with
    # the batch tile on the lane axis.
    x = x_ref[...]                                                     # (D_in, TB)
    # layer1: Linear(D_in, 20) + tanh
    h1 = jnp.tanh(
        jnp.dot(w1_ref[...], x, preferred_element_type=jnp.float32) + b1_ref[...]
    )                                                                  # (20, TB)
    # layer2: Linear(20, 20) + tanh
    h2 = jnp.tanh(
        jnp.dot(w2_ref[...], h1, preferred_element_type=jnp.float32) + b2_ref[...]
    )                                                                  # (20, TB)
    # layer3: Linear(20, D_out) (no activation)
    o_ref[...] = (
        jnp.dot(w3_ref[...], h2, preferred_element_type=jnp.float32) + b3_ref[...]
    ).astype(o_ref.dtype)                                              # (D_out, TB)


def ffnnc_forward(x, params, *, batch_tile=2048, single_block_max=4096):
    """x: (B, D_in) float32.  params: PyTorch-layout weights (out, in) and
    column biases (out, 1).  Returns (B, D_out) float32."""
    B, d_in = x.shape
    d_out = params["w3"].shape[0]

    # Lane-dense layout: batch on the last (lane) axis.
    xt = jnp.asarray(x, jnp.float32).T                 # (D_in, B)

    # Adaptive batch tiling.  Lane dim of every block must be a multiple of 128.
    b_pad128 = pl.cdiv(B, 128) * 128
    if b_pad128 <= single_block_max:
        tb = b_pad128                                  # single grid step
    else:
        tb = max(128, (int(batch_tile) // 128) * 128)  # pipelined grid
    b_pad = pl.cdiv(B, tb) * tb
    if b_pad != B:
        xt = jnp.pad(xt, ((0, 0), (0, b_pad - B)))
    grid = (b_pad // tb,)

    # Weights/biases: full-array blocks with a constant index_map so they are
    # DMA'd once and stay resident in VMEM across grid steps.
    def pinned(arr):
        return pl.BlockSpec(arr.shape, lambda i: (0, 0))

    out_t = pl.pallas_call(
        ffnnc_kernel,
        out_shape=jax.ShapeDtypeStruct((d_out, b_pad), jnp.float32),
        grid=grid,
        in_specs=[
            pl.BlockSpec((d_in, tb), lambda i: (0, i)),      # x tile
            pinned(params["w1"]), pinned(params["b1"]),
            pinned(params["w2"]), pinned(params["b2"]),
            pinned(params["w3"]), pinned(params["b3"]),
        ],
        out_specs=pl.BlockSpec((d_out, tb), lambda i: (0, i)),
        compiler_params=pltpu.CompilerParams(
            dimension_semantics=("parallel",),
        ),
    )(
        xt,
        params["w1"], params["b1"],
        params["w2"], params["b2"],
        params["w3"], params["b3"],
    )

    # Back to PyTorch (B, D_out) semantics, dropping batch padding.
    return out_t[:, :B].T


# Jitted entry point: fuses the wrapper-side transpose/pad/slice with the
# pallas_call into a single dispatch.
ffnnc_forward_jit = jax.jit(
    ffnnc_forward, static_argnames=("batch_tile", "single_block_max")
)


def init_params(key, d_in=6, d_hidden=20, d_out=8):
    """Deterministic init mimicking torch.nn.Linear default (uniform +-1/sqrt(fan_in)).
    Weights stored in PyTorch (out, in) layout; biases as (out, 1) columns."""
    ks = jax.random.split(key, 6)

    def linear(kw, kb, fan_in, fan_out):
        bound = 1.0 / jnp.sqrt(jnp.float32(fan_in))
        w = jax.random.uniform(kw, (fan_out, fan_in), jnp.float32, -bound, bound)
        b = jax.random.uniform(kb, (fan_out, 1), jnp.float32, -bound, bound)
        return w, b

    w1, b1 = linear(ks[0], ks[1], d_in, d_hidden)
    w2, b2 = linear(ks[2], ks[3], d_hidden, d_hidden)
    w3, b3 = linear(ks[4], ks[5], d_hidden, d_out)
    return {"w1": w1, "b1": b1, "w2": w2, "b2": b2, "w3": w3, "b3": b3}


def reference_forward(x, params):
    h1 = jnp.tanh(x @ params["w1"].T + params["b1"][:, 0])
    h2 = jnp.tanh(h1 @ params["w2"].T + params["b2"][:, 0])
    return h2 @ params["w3"].T + params["b3"][:, 0]


if __name__ == "__main__":
    key = jax.random.PRNGKey(0)
    k_params, k_x = jax.random.split(key)

    D_in, D_out = 6, 8
    B = 200  # deliberately not a multiple of 128 to exercise padding
    params = init_params(k_params, d_in=D_in, d_hidden=20, d_out=D_out)
    x = jax.random.normal(k_x, (B, D_in), dtype=jnp.float32)

    ref = reference_forward(x, params)

    # Path 1: adaptive single-block (default) — one grid step.
    out_single = jax.block_until_ready(ffnnc_forward_jit(x, params))
    assert out_single.shape == (B, D_out), out_single.shape
    assert jnp.allclose(out_single, ref, atol=1e-5, rtol=1e-5), "single-block mismatch"

    # Path 2: force the tiled/pipelined grid path (2 grid steps at this size).
    out_grid = jax.block_until_ready(
        ffnnc_forward_jit(x, params, batch_tile=128, single_block_max=0)
    )
    assert out_grid.shape == (B, D_out), out_grid.shape
    assert jnp.allclose(out_grid, ref, atol=1e-5, rtol=1e-5), "grid-path mismatch"

    print("KERNEL_OK")
</pallas_src>

<mosaic_0001>
module attributes {stable_mosaic.version = 11 : i64} {
  func.func @ffnnc_kernel(%arg0: i32, %arg1: memref<6x256xf32, #tpu.memory_space<vmem>>, %arg2: memref<20x6xf32, #tpu.memory_space<vmem>>, %arg3: memref<20x1xf32, #tpu.memory_space<vmem>>, %arg4: memref<20x20xf32, #tpu.memory_space<vmem>>, %arg5: memref<20x1xf32, #tpu.memory_space<vmem>>, %arg6: memref<8x20xf32, #tpu.memory_space<vmem>>, %arg7: memref<8x1xf32, #tpu.memory_space<vmem>>, %arg8: memref<8x256xf32, #tpu.memory_space<vmem>>) attributes {dimension_semantics = [#tpu.dimension_semantics<parallel>], iteration_bounds = array<i64: 1>, scalar_prefetch = 0 : i64, scratch_operands = 0 : i64, tpu.core_type = #tpu.core_type<tc>, window_params = [{transform_indices = @transform_0, window_bounds = array<i64: 6, 256>}, {pipeline_mode = #tpu.pipeline_mode<synchronous>, transform_indices = @transform_1, window_bounds = array<i64: 20, 6>}, {pipeline_mode = #tpu.pipeline_mode<synchronous>, transform_indices = @transform_2, window_bounds = array<i64: 20, 1>}, {pipeline_mode = #tpu.pipeline_mode<synchronous>, transform_indices = @transform_3, window_bounds = array<i64: 20, 20>}, {pipeline_mode = #tpu.pipeline_mode<synchronous>, transform_indices = @transform_4, window_bounds = array<i64: 20, 1>}, {pipeline_mode = #tpu.pipeline_mode<synchronous>, transform_indices = @transform_5, window_bounds = array<i64: 8, 20>}, {pipeline_mode = #tpu.pipeline_mode<synchronous>, transform_indices = @transform_6, window_bounds = array<i64: 8, 1>}, {transform_indices = @transform_7, window_bounds = array<i64: 8, 256>}]} {
    %c0 = arith.constant 0 : index
    %c0_0 = arith.constant 0 : index
    %0 = vector.load %arg1[%c0, %c0_0] : memref<6x256xf32, #tpu.memory_space<vmem>>, vector<6x256xf32>
    %c0_1 = arith.constant 0 : index
    %c0_2 = arith.constant 0 : index
    %1 = vector.load %arg2[%c0_1, %c0_2] : memref<20x6xf32, #tpu.memory_space<vmem>>, vector<20x6xf32>
    %cst = arith.constant dense<0.000000e+00> : vector<20x256xf32>
    %2 = tpu.matmul %1, %0, %cst {dimension_numbers = #tpu.dot_dimension_numbers<[1], [0], [0], [1], [0, 0, 1, 1], [], []>} : vector<20x6xf32>, vector<6x256xf32>, vector<20x256xf32> -> vector<20x256xf32>
    %c0_3 = arith.constant 0 : index
    %c0_4 = arith.constant 0 : index
    %3 = vector.load %arg3[%c0_3, %c0_4] : memref<20x1xf32, #tpu.memory_space<vmem>>, vector<20x1xf32>
    %4 = vector.broadcast %3 : vector<20x1xf32> to vector<20x256xf32>
    %5 = arith.addf %2, %4 : vector<20x256xf32>
    %6 = math.tanh %5 : vector<20x256xf32>
    %c0_5 = arith.constant 0 : index
    %c0_6 = arith.constant 0 : index
    %7 = vector.load %arg4[%c0_5, %c0_6] : memref<20x20xf32, #tpu.memory_space<vmem>>, vector<20x20xf32>
    %cst_7 = arith.constant dense<0.000000e+00> : vector<20x256xf32>
    %8 = tpu.matmul %7, %6, %cst_7 {dimension_numbers = #tpu.dot_dimension_numbers<[1], [0], [0], [1], [0, 0, 1, 1], [], []>} : vector<20x20xf32>, vector<20x256xf32>, vector<20x256xf32> -> vector<20x256xf32>
    %c0_8 = arith.constant 0 : index
    %c0_9 = arith.constant 0 : index
    %9 = vector.load %arg5[%c0_8, %c0_9] : memref<20x1xf32, #tpu.memory_space<vmem>>, vector<20x1xf32>
    %10 = vector.broadcast %9 : vector<20x1xf32> to vector<20x256xf32>
    %11 = arith.addf %8, %10 : vector<20x256xf32>
    %12 = math.tanh %11 : vector<20x256xf32>
    %c0_10 = arith.constant 0 : index
    %c0_11 = arith.constant 0 : index
    %13 = vector.load %arg6[%c0_10, %c0_11] : memref<8x20xf32, #tpu.memory_space<vmem>>, vector<8x20xf32>
    %cst_12 = arith.constant dense<0.000000e+00> : vector<8x256xf32>
    %14 = tpu.matmul %13, %12, %cst_12 {dimension_numbers = #tpu.dot_dimension_numbers<[1], [0], [0], [1], [0, 0, 1, 1], [], []>} : vector<8x20xf32>, vector<20x256xf32>, vector<8x256xf32> -> vector<8x256xf32>
    %c0_13 = arith.constant 0 : index
    %c0_14 = arith.constant 0 : index
    %15 = vector.load %arg7[%c0_13, %c0_14] : memref<8x1xf32, #tpu.memory_space<vmem>>, vector<8x1xf32>
    %16 = vector.broadcast %15 : vector<8x1xf32> to vector<8x256xf32>
    %17 = arith.addf %14, %16 : vector<8x256xf32>
    %c0_15 = arith.constant 0 : index
    %c0_16 = arith.constant 0 : index
    %18 = vector.load %arg8[%c0_15, %c0_16] : memref<8x256xf32, #tpu.memory_space<vmem>>, vector<8x256xf32>
    tpu.vector_store %arg8[%c0_15, %c0_16], %17 {strides = array<i32>} : memref<8x256xf32, #tpu.memory_space<vmem>>, vector<8x256xf32>,
    return
  }
  func.func @transform_0(%arg0: i32) -> (i32, i32) {
    %c0_i32 = arith.constant 0 : i32
    %c0_i32_0 = arith.constant 0 : i32
    return %c0_i32, %arg0 : i32, i32
  }
  func.func @transform_1(%arg0: i32) -> (i32, i32) {
    %c0_i32 = arith.constant 0 : i32
    %c0_i32_0 = arith.constant 0 : i32
    %c0_i32_1 = arith.constant 0 : i32
    return %c0_i32, %c0_i32_0 : i32, i32
  }
  func.func @transform_2(%arg0: i32) -> (i32, i32) {
    %c0_i32 = arith.constant 0 : i32
    %c0_i32_0 = arith.constant 0 : i32
    %c0_i32_1 = arith.constant 0 : i32
    return %c0_i32, %c0_i32_0 : i32, i32
  }
  func.func @transform_3(%arg0: i32) -> (i32, i32) {
    %c0_i32 = arith.constant 0 : i32
    %c0_i32_0 = arith.constant 0 : i32
    %c0_i32_1 = arith.constant 0 : i32
    return %c0_i32, %c0_i32_0 : i32, i32
  }
  func.func @transform_4(%arg0: i32) -> (i32, i32) {
    %c0_i32 = arith.constant 0 : i32
    %c0_i32_0 = arith.constant 0 : i32
    %c0_i32_1 = arith.constant 0 : i32
    return %c0_i32, %c0_i32_0 : i32, i32
  }
  func.func @transform_5(%arg0: i32) -> (i32, i32) {
    %c0_i32 = arith.constant 0 : i32
    %c0_i32_0 = arith.constant 0 : i32
    %c0_i32_1 = arith.constant 0 : i32
    return %c0_i32, %c0_i32_0 : i32, i32
  }
  func.func @transform_6(%arg0: i32) -> (i32, i32) {
    %c0_i32 = arith.constant 0 : i32
    %c0_i32_0 = arith.constant 0 : i32
    %c0_i32_1 = arith.constant 0 : i32
    return %c0_i32, %c0_i32_0 : i32, i32
  }
  func.func @transform_7(%arg0: i32) -> (i32, i32) {
    %c0_i32 = arith.constant 0 : i32
    %c0_i32_0 = arith.constant 0 : i32
    return %c0_i32, %arg0 : i32, i32
  }
}

</mosaic_0001>

<llo_original>
// kernel: ffnnc_forward.1
$region0: #{ffnnc_forward.1}
  #allocation0 [shape = 'u32[]', space=smem, size = 0x4, offset = 0x4, fixed_abs, tag = 'smem constant byte address 0x4 - core index']
  #allocation1 [shape = 'u32[144,128]{1,0:T(1,128)}', space=vmem, size = 0x12000, scoped, tag = 'internal scratch']
  %s0 = inlined_call_operand.vmem [shape: f32[6,256], index: 0, kind: input, shape index: {}]
  %s1 = inlined_call_operand.vmem [shape: f32[20,6], index: 1, kind: input, shape index: {}]
  %s2 = inlined_call_operand.vmem [shape: f32[20,1], index: 2, kind: input, shape index: {}]
  %s3 = inlined_call_operand.vmem [shape: f32[20,20], index: 3, kind: input, shape index: {}]
  %s4 = inlined_call_operand.vmem [shape: f32[20,1], index: 4, kind: input, shape index: {}]
  %s5 = inlined_call_operand.vmem [shape: f32[8,20], index: 5, kind: input, shape index: {}]
  %s6 = inlined_call_operand.vmem [shape: f32[8,1], index: 6, kind: input, shape index: {}]
  %s7 = inlined_call_operand.vmem [shape: f32[8,256], index: 7, kind: output, shape index: {}]
  %s8 = sld [smem:[#allocation0]]
  $region38: #{ffnnc_forward.1} parent=0
    _
  %s10 = ssub.s32 1, %s8
  %s11 = scalar_select 0, %s10, %s8
  // Predicated region
  $region2: #{ffnnc_forward.1} parent=0 // pred_check
    _
  $region3: #{ffnnc_forward.1} parent=0 // pred_check_branch
    %13 = sbr.rel (0) target = $region5
  $region4: #{ffnnc_forward.1} parent=0 // pred_region
    _
  $region5: #{ffnnc_forward.1} parent=0 // pred_fallthru
    _
  // Predicated region
  $region6: #{ffnnc_forward.1} parent=0 // pred_check
    _
  $region7: #{ffnnc_forward.1} parent=0 // pred_check_branch
    %15 = sbr.rel (0) target = $region9
  $region8: #{ffnnc_forward.1} parent=0 // pred_region
    _
  $region9: #{ffnnc_forward.1} parent=0 // pred_fallthru
    _
  // Predicated region
  $region10: #{ffnnc_forward.1} parent=0 // pred_check
    _
  $region11: #{ffnnc_forward.1} parent=0 // pred_check_branch
    %17 = sbr.rel (0) target = $region13
  $region12: #{ffnnc_forward.1} parent=0 // pred_region
    _
  $region13: #{ffnnc_forward.1} parent=0 // pred_fallthru
    _
  // Predicated region
  $region14: #{ffnnc_forward.1} parent=0 // pred_check
    _
  $region15: #{ffnnc_forward.1} parent=0 // pred_check_branch
    %19 = sbr.rel (0) target = $region17
  $region16: #{ffnnc_forward.1} parent=0 // pred_region
    _
  $region17: #{ffnnc_forward.1} parent=0 // pred_fallthru
    _
  // Predicated region
  $region18: #{ffnnc_forward.1} parent=0 // pred_check
    _
  $region19: #{ffnnc_forward.1} parent=0 // pred_check_branch
    %21 = sbr.rel (0) target = $region21
  $region20: #{ffnnc_forward.1} parent=0 // pred_region
    _
  $region21: #{ffnnc_forward.1} parent=0 // pred_fallthru
    _
  // Predicated region
  $region22: #{ffnnc_forward.1} parent=0 // pred_check
    _
  $region23: #{ffnnc_forward.1} parent=0 // pred_check_branch
    %23 = sbr.rel (0) target = $region25
  $region24: #{ffnnc_forward.1} parent=0 // pred_region
    _
  $region25: #{ffnnc_forward.1} parent=0 // pred_fallthru
    _
  // Predicated region
  $region26: #{ffnnc_forward.1} parent=0 // pred_check
    _
  $region27: #{ffnnc_forward.1} parent=0 // pred_check_branch
    %25 = sbr.rel (0) target = $region29
  $region28: #{ffnnc_forward.1} parent=0 // pred_region
    _
  $region29: #{ffnnc_forward.1} parent=0 // pred_fallthru
    _
  %v26 = vld [vmem:[%s0] sm:$0x3f]
  %v27 = vld [vmem:[%s0 + $0x8] sm:$0x3f]
  %v28 = vld [vmem:[%s1] sm:$0xff]
  %v29 = vld [vmem:[%s1 + $0x8] sm:$0xff]
  %v30 = vld [vmem:[%s1 + $0x10] sm:$0xf]
  %v31 = vld [vmem:[%s2] sm:$0xff]
  %v32 = vld [vmem:[%s2 + $0x8] sm:$0xff]
  %v33 = vld [vmem:[%s2 + $0x10] sm:$0xf]
  %35 = vset.pattern.permute.xlu0 0
  %36 = vperm.xlu0 %35, %v31
  %v37 = vpop.permute.xlu0 %36
  %40 = vset.pattern.permute.xlu0 0
  %41 = vperm.xlu0 %40, %v32
  %v42 = vpop.permute.xlu0 %41
  %45 = vset.pattern.permute.xlu0 0
  %46 = vperm.xlu0 %45, %v33
  %v47 = vpop.permute.xlu0 %46
  %vm49 = vcmask 48128
  %v51 = vsel %vm49, %v28, 0
  %v54 = vsel %vm49, %v29, 0
  %v57 = vsel %vm49, %v30, 0
  %vm59 = vcmask 1045504
  %v61 = vsel %vm59, %v26, 0
  %v64 = vsel %vm59, %v27, 0
  %66 = vmatprep.subr.mxu0 0.0
  %67 = vmatpush1.msra.mxu0 0.0
  %68 = vmatprep.subr.mxu0 0.0
  %69 = vmatpush1.msra.mxu0 0.0
  %70 = vmatprep.subr.mxu0 0.0
  %71 = vmatpush1.msra.mxu0 0.0
  %72 = vmatprep.subr.mxu0 0.0
  %73 = vmatpush1.msra.mxu0 0.0
  %74 = vmatprep.subr.mxu0 0.0
  %75 = vmatpush1.msra.mxu0 0.0
  %76 = vmatprep.subr.mxu0 0.0
  %77 = vmatpush1.msra.mxu0 0.0
  %78 = vmatprep.subr.mxu0 0.0
  %79 = vmatpush1.msra.mxu0 0.0
  %80 = vmatprep.subr.mxu0 0.0
  %81 = vmatpush1.msra.mxu0 0.0
  %82 = vmatprep.subr.mxu0 0.0
  %83 = vmatpush1.msra.mxu0 0.0
  %84 = vmatprep.subr.mxu0 0.0
  %85 = vmatpush1.msra.mxu0 0.0
  %86 = vmatprep.subr.mxu0 0.0
  %87 = vmatpush1.msra.mxu0 0.0
  %88 = vmatprep.subr.mxu0 0.0
  %89 = vmatpush1.msra.mxu0 0.0
  %90 = vmatprep.subr.mxu0 0.0
  %91 = vmatpush1.msra.mxu0 0.0
  %92 = vmatprep.subr.mxu0 0.0
  %93 = vmatpush1.msra.mxu0 0.0
  %94 = vmatprep.subr.mxu0 0.0
  %95 = vmatpush1.msra.mxu0 0.0
  %96 = vmatprep.subr.mxu0 %v64
  %97 = vmatpush1.msra.mxu0 %v61
  %98 = vmatprep.subr.mxu0 0.0
  %99 = vmatpush2.msra.mxu0 0.0
  %100 = vmatprep.subr.mxu0 0.0
  %101 = vmatpush2.msra.mxu0 0.0
  %102 = vmatprep.subr.mxu0 0.0
  %103 = vmatpush2.msra.mxu0 0.0
  %104 = vmatprep.subr.mxu0 0.0
  %105 = vmatpush2.msra.mxu0 0.0
  %106 = vmatprep.subr.mxu0 0.0
  %107 = vmatpush2.msra.mxu0 0.0
  %108 = vmatprep.subr.mxu0 0.0
  %109 = vmatpush2.msra.mxu0 0.0
  %110 = vmatprep.subr.mxu0 0.0
  %111 = vmatpush2.msra.mxu0 0.0
  %112 = vmatprep.subr.mxu0 0.0
  %113 = vmatpush2.msra.mxu0 0.0
  %114 = vmatprep.subr.mxu0 0.0
  %115 = vmatpush2.msra.mxu0 0.0
  %116 = vmatprep.subr.mxu0 0.0
  %117 = vmatpush2.msra.mxu0 0.0
  %118 = vmatprep.subr.mxu0 0.0
  %119 = vmatpush2.msra.mxu0 0.0
  %120 = vmatprep.subr.mxu0 0.0
  %121 = vmatpush2.msra.mxu0 0.0
  %122 = vmatprep.subr.mxu0 0.0
  %123 = vmatpush2.msra.mxu0 0.0
  %124 = vmatprep.subr.mxu0 0.0
  %125 = vmatpush2.msra.mxu0 0.0
  %126 = vmatprep.subr.mxu0 0.0
  %127 = vmatpush2.msra.mxu0 0.0
  %128 = vmatprep.subr.mxu0 0.0
  %129 = vmatpush2.msra.mxu0 0.0
  %130 = vmatprep.mubr.f32.mxu0 0.0
  %131 = vmatmul.mubr.f32.gmra.mxu0 %v51
  %v132 = vpop.f32.mrf.mxu0
  %v133 = vadd.f32 %v37, %v132
  %v134 = vpop.f32.mrf.mxu0
  %v135 = vadd.f32 %v37, %v134
  %136 = vmatprep.mubr.f32.mxu0 0.0
  %137 = vmatmul.mubr.f32.gmra.mxu0 %v54
  %v138 = vpop.f32.mrf.mxu0
  %v139 = vadd.f32 %v42, %v138
  %v140 = vpop.f32.mrf.mxu0
  %v141 = vadd.f32 %v42, %v140
  %142 = vmatprep.mubr.f32.mxu0 0.0
  %143 = vmatmul.mubr.f32.gmra.mxu0 %v57
  %v144 = vpop.f32.mrf.mxu0
  %v145 = vadd.f32 %v47, %v144
  %v146 = vpop.f32.mrf.mxu0
  %v147 = vadd.f32 %v47, %v146
  %148 = vdwg.mxu0
  %v149 = vtanh.pop %v133
  %v150 = vtanh.pop %v135
  %v151 = vtanh.pop %v139
  %v152 = vtanh.pop %v141
  %v153 = vtanh.pop %v145
  %v154 = vtanh.pop %v147
  %v155 = vld [vmem:[%s3] sm:$0xff]
  %v156 = vld [vmem:[%s3 + $0x8] sm:$0xff]
  %v157 = vld [vmem:[%s3 + $0x10] sm:$0xf]
  %v158 = vld [vmem:[%s4] sm:$0xff]
  %v159 = vld [vmem:[%s4 + $0x8] sm:$0xff]
  %v160 = vld [vmem:[%s4 + $0x10] sm:$0xf]
  %162 = vset.pattern.permute.xlu0 0
  %163 = vperm.xlu0 %162, %v158
  %v164 = vpop.permute.xlu0 %163
  %167 = vset.pattern.permute.xlu0 0
  %168 = vperm.xlu0 %167, %v159
  %v169 = vpop.permute.xlu0 %168
  %172 = vset.pattern.permute.xlu0 0
  %173 = vperm.xlu0 %172, %v160
  %v174 = vpop.permute.xlu0 %173
  %vm176 = vcmask 162816
  %v178 = vsel %vm176, %v155, 0
  %v181 = vsel %vm176, %v156, 0
  %v184 = vsel %vm176, %v157, 0
  %vm186 = vcmask 1043456
  %v188 = vsel %vm186, %v153, 0
  %v191 = vsel %vm186, %v154, 0
  %193 = vmatprep.subr.mxu0 0.0
  %194 = vmatpush1.msra.mxu0 0.0
  %195 = vmatprep.subr.mxu0 0.0
  %196 = vmatpush1.msra.mxu0 0.0
  %197 = vmatprep.subr.mxu0 0.0
  %198 = vmatpush1.msra.mxu0 0.0
  %199 = vmatprep.subr.mxu0 0.0
  %200 = vmatpush1.msra.mxu0 0.0
  %201 = vmatprep.subr.mxu0 0.0
  %202 = vmatpush1.msra.mxu0 0.0
  %203 = vmatprep.subr.mxu0 0.0
  %204 = vmatpush1.msra.mxu0 0.0
  %205 = vmatprep.subr.mxu0 0.0
  %206 = vmatpush1.msra.mxu0 0.0
  %207 = vmatprep.subr.mxu0 0.0
  %208 = vmatpush1.msra.mxu0 0.0
  %209 = vmatprep.subr.mxu0 0.0
  %210 = vmatpush1.msra.mxu0 0.0
  %211 = vmatprep.subr.mxu0 0.0
  %212 = vmatpush1.msra.mxu0 0.0
  %213 = vmatprep.subr.mxu0 0.0
  %214 = vmatpush1.msra.mxu0 0.0
  %215 = vmatprep.subr.mxu0 0.0
  %216 = vmatpush1.msra.mxu0 0.0
  %217 = vmatprep.subr.mxu0 0.0
  %218 = vmatpush1.msra.mxu0 0.0
  %219 = vmatprep.subr.mxu0 %v191
  %220 = vmatpush1.msra.mxu0 %v188
  %221 = vmatprep.subr.mxu0 %v152
  %222 = vmatpush1.msra.mxu0 %v151
  %223 = vmatprep.subr.mxu0 %v150
  %224 = vmatpush1.msra.mxu0 %v149
  %225 = vmatprep.subr.mxu0 0.0
  %226 = vmatpush2.msra.mxu0 0.0
  %227 = vmatprep.subr.mxu0 0.0
  %228 = vmatpush2.msra.mxu0 0.0
  %229 = vmatprep.subr.mxu0 0.0
  %230 = vmatpush2.msra.mxu0 0.0
  %231 = vmatprep.subr.mxu0 0.0
  %232 = vmatpush2.msra.mxu0 0.0
  %233 = vmatprep.subr.mxu0 0.0
  %234 = vmatpush2.msra.mxu0 0.0
  %235 = vmatprep.subr.mxu0 0.0
  %236 = vmatpush2.msra.mxu0 0.0
  %237 = vmatprep.subr.mxu0 0.0
  %238 = vmatpush2.msra.mxu0 0.0
  %239 = vmatprep.subr.mxu0 0.0
  %240 = vmatpush2.msra.mxu0 0.0
  %241 = vmatprep.subr.mxu0 0.0
  %242 = vmatpush2.msra.mxu0 0.0
  %243 = vmatprep.subr.mxu0 0.0
  %244 = vmatpush2.msra.mxu0 0.0
  %245 = vmatprep.subr.mxu0 0.0
  %246 = vmatpush2.msra.mxu0 0.0
  %247 = vmatprep.subr.mxu0 0.0
  %248 = vmatpush2.msra.mxu0 0.0
  %249 = vmatprep.subr.mxu0 0.0
  %250 = vmatpush2.msra.mxu0 0.0
  %251 = vmatprep.subr.mxu0 0.0
  %252 = vmatpush2.msra.mxu0 0.0
  %253 = vmatprep.subr.mxu0 0.0
  %254 = vmatpush2.msra.mxu0 0.0
  %255 = vmatprep.subr.mxu0 0.0
  %256 = vmatpush2.msra.mxu0 0.0
  %257 = vmatprep.mubr.f32.mxu0 0.0
  %258 = vmatmul.mubr.f32.gmra.mxu0 %v178
  %v259 = vpop.f32.mrf.mxu0
  %v260 = vadd.f32 %v164, %v259
  %v261 = vpop.f32.mrf.mxu0
  %v262 = vadd.f32 %v164, %v261
  %263 = vmatprep.mubr.f32.mxu0 0.0
  %264 = vmatmul.mubr.f32.gmra.mxu0 %v181
  %v265 = vpop.f32.mrf.mxu0
  %v266 = vadd.f32 %v169, %v265
  %v267 = vpop.f32.mrf.mxu0
  %v268 = vadd.f32 %v169, %v267
  %269 = vmatprep.mubr.f32.mxu0 0.0
  %270 = vmatmul.mubr.f32.gmra.mxu0 %v184
  %v271 = vpop.f32.mrf.mxu0
  %v272 = vadd.f32 %v174, %v271
  %v273 = vpop.f32.mrf.mxu0
  %v274 = vadd.f32 %v174, %v273
  %275 = vdwg.mxu0
  %v276 = vtanh.pop %v260
  %v277 = vtanh.pop %v262
  %v278 = vtanh.pop %v266
  %v279 = vtanh.pop %v268
  %v280 = vtanh.pop %v272
  %v281 = vtanh.pop %v274
  %v282 = vld [vmem:[%s5] sm:$0xff]
  %v283 = vld [vmem:[%s6] sm:$0xff]
  %285 = vset.pattern.permute.xlu0 0
  %286 = vperm.xlu0 %285, %v283
  %v287 = vpop.permute.xlu0 %286
  %v290 = vsel %vm176, %v282, 0
  %v293 = vsel %vm186, %v280, 0
  %v296 = vsel %vm186, %v281, 0
  %298 = vmatprep.subr.mxu0 0.0
  %299 = vmatpush1.msra.mxu0 0.0
  %300 = vmatprep.subr.mxu0 0.0
  %301 = vmatpush1.msra.mxu0 0.0
  %302 = vmatprep.subr.mxu0 0.0
  %303 = vmatpush1.msra.mxu0 0.0
  %304 = vmatprep.subr.mxu0 0.0
  %305 = vmatpush1.msra.mxu0 0.0
  %306 = vmatprep.subr.mxu0 0.0
  %307 = vmatpush1.msra.mxu0 0.0
  %308 = vmatprep.subr.mxu0 0.0
  %309 = vmatpush1.msra.mxu0 0.0
  %310 = vmatprep.subr.mxu0 0.0
  %311 = vmatpush1.msra.mxu0 0.0
  %312 = vmatprep.subr.mxu0 0.0
  %313 = vmatpush1.msra.mxu0 0.0
  %314 = vmatprep.subr.mxu0 0.0
  %315 = vmatpush1.msra.mxu0 0.0
  %316 = vmatprep.subr.mxu0 0.0
  %317 = vmatpush1.msra.mxu0 0.0
  %318 = vmatprep.subr.mxu0 0.0
  %319 = vmatpush1.msra.mxu0 0.0
  %320 = vmatprep.subr.mxu0 0.0
  %321 = vmatpush1.msra.mxu0 0.0
  %322 = vmatprep.subr.mxu0 0.0
  %323 = vmatpush1.msra.mxu0 0.0
  %324 = vmatprep.subr.mxu0 %v296
  %325 = vmatpush1.msra.mxu0 %v293
  %326 = vmatprep.subr.mxu0 %v279
  %327 = vmatpush1.msra.mxu0 %v278
  %328 = vmatprep.subr.mxu0 %v277
  %329 = vmatpush1.msra.mxu0 %v276
  %330 = vmatprep.subr.mxu0 0.0
  %331 = vmatpush2.msra.mxu0 0.0
  %332 = vmatprep.subr.mxu0 0.0
  %333 = vmatpush2.msra.mxu0 0.0
  %334 = vmatprep.subr.mxu0 0.0
  %335 = vmatpush2.msra.mxu0 0.0
  %336 = vmatprep.subr.mxu0 0.0
  %337 = vmatpush2.msra.mxu0 0.0
  %338 = vmatprep.subr.mxu0 0.0
  %339 = vmatpush2.msra.mxu0 0.0
  %340 = vmatprep.subr.mxu0 0.0
  %341 = vmatpush2.msra.mxu0 0.0
  %342 = vmatprep.subr.mxu0 0.0
  %343 = vmatpush2.msra.mxu0 0.0
  %344 = vmatprep.subr.mxu0 0.0
  %345 = vmatpush2.msra.mxu0 0.0
  %346 = vmatprep.subr.mxu0 0.0
  %347 = vmatpush2.msra.mxu0 0.0
  %348 = vmatprep.subr.mxu0 0.0
  %349 = vmatpush2.msra.mxu0 0.0
  %350 = vmatprep.subr.mxu0 0.0
  %351 = vmatpush2.msra.mxu0 0.0
  %352 = vmatprep.subr.mxu0 0.0
  %353 = vmatpush2.msra.mxu0 0.0
  %354 = vmatprep.subr.mxu0 0.0
  %355 = vmatpush2.msra.mxu0 0.0
  %356 = vmatprep.subr.mxu0 0.0
  %357 = vmatpush2.msra.mxu0 0.0
  %358 = vmatprep.subr.mxu0 0.0
  %359 = vmatpush2.msra.mxu0 0.0
  %360 = vmatprep.subr.mxu0 0.0
  %361 = vmatpush2.msra.mxu0 0.0
  %362 = vmatprep.mubr.f32.mxu0 0.0
  %363 = vmatmul.mubr.f32.gmra.mxu0 %v290
  %v364 = vpop.f32.mrf.mxu0
  %v365 = vadd.f32 %v287, %v364
  %v366 = vpop.f32.mrf.mxu0
  %v367 = vadd.f32 %v287, %v366
  %368 = vdwg.mxu0
  %369 = vst [vmem:[%s7] sm:$0xff] %v365
  %370 = vst [vmem:[%s7 + $0x8] sm:$0xff] %v367
  // Predicated region
  $region30: #{ffnnc_forward.1} parent=0 // pred_check
    _
  $region31: #{ffnnc_forward.1} parent=0 // pred_check_branch
    %372 = sbr.rel (0) target = $region33
  $region32: #{ffnnc_forward.1} parent=0 // pred_region
    _
  $region33: #{ffnnc_forward.1} parent=0 // pred_fallthru
    _
  // Predicated region
  $region34: #{ffnnc_forward.1} parent=0 // pred_check
    _
  $region35: #{ffnnc_forward.1} parent=0 // pred_check_branch
    %374 = sbr.rel (0) target = $region37
  $region36: #{ffnnc_forward.1} parent=0 // pred_region
    _
  $region37: #{ffnnc_forward.1} parent=0 // pred_fallthru
    _

</llo_original>
